<compile_context>
chip_gen: v5e
topology: v5e:2x2
jax: 0.10.0
libtpu: 0.0.40
codegen_flags: <defaults>
</compile_context>

<pallas_src>
import functools

import jax
import jax.numpy as jnp
from jax.experimental import pallas as pl
from jax.experimental.pallas import tpu as pltpu


def _ts_skew_kernel(x_ref, o_ref, *, window, strides, s_reg, extra_start, eps):
    # x_ref block: (Bb, T, F); o_ref block: (Bb, F, S)
    inv_w = jnp.float32(1.0 / window)

    def offset_slab(k):
        # Time rows k, k+strides, ..., k+(s_reg-1)*strides -> (Bb, s_reg, F).
        if strides == 1:
            sl = x_ref[:, pl.ds(k, s_reg), :]
        else:
            sl = x_ref[:, pl.ds(k, s_reg, stride=strides), :]
        return sl.astype(jnp.float32)  # compute in f32 (v5e has no bf16 VPU path)

    slabs = [offset_slab(k) for k in range(window)]  # window x (Bb, s_reg, F)

    mean = slabs[0]
    for k in range(1, window):
        mean = mean + slabs[k]
    mean = mean * inv_w

    m2 = jnp.zeros_like(mean)
    m3 = jnp.zeros_like(mean)
    for k in range(window):
        d = slabs[k] - mean
        d2 = d * d
        m2 = m2 + d2
        m3 = m3 + d2 * d
    m2 = m2 * inv_w + eps                    # E[(x-mu)^2] + eps  (>0 always)
    m3 = m3 * inv_w                          # E[(x-mu)^3]
    skew = m3 / (m2 * jnp.sqrt(m2))          # m3 / m2**1.5
    # PyTorch replaces NaN rows with (mean - mean) == 0 for finite inputs.
    skew = jnp.where(jnp.isnan(skew), jnp.float32(0.0), skew)   # (Bb, s_reg, F)

    if extra_start is not None:
        # Appended irregular last window start: (T-window) % strides != 0.
        w = x_ref[:, pl.ds(extra_start, window), :].astype(jnp.float32)
        mu = jnp.mean(w, axis=1, keepdims=True)
        d = w - mu
        m2e = jnp.mean(d * d, axis=1) + eps
        m3e = jnp.mean(d * d * d, axis=1)
        sk = m3e / (m2e * jnp.sqrt(m2e))
        sk = jnp.where(jnp.isnan(sk), jnp.float32(0.0), sk)       # (Bb, F)
        skew = jnp.concatenate([skew, sk[:, None, :]], axis=1)    # (Bb, S, F)

    # Fuse the (S, F) -> (F, S) transpose into the existing writeback so the
    # output hits HBM exactly once.
    o_ref[...] = jnp.transpose(skew, (0, 2, 1)).astype(o_ref.dtype)


def ts_skew(x, window=5, strides=1, eps=1e-6):
    """x: (B, T, F) -> (B, F, S), matching the PyTorch ts_skew module."""
    B, T, F = x.shape
    iter_list = list(range(0, T - window + 1, strides))
    s_reg = len(iter_list)
    extra_start = None
    if (T - window) not in iter_list:
        iter_list.append(T - window)
        extra_start = T - window
    S = len(iter_list)

    # Batch-block sizing: largest block that double-buffers within a
    # conservative VMEM budget (safe for v7x's 64 MiB VMEM), but keep >=2 grid
    # steps when possible so both v7x TensorCores get work.
    bytes_per_batch = 4 * 2 * (T * F + F * S)      # f32, in + out, double-buffered
    budget = 8 * 1024 * 1024
    Bb = max(1, min(B, budget // max(bytes_per_batch, 1)))
    if B >= 2:
        Bb = min(Bb, (B + 1) // 2)
    while B % Bb:
        Bb -= 1
    grid = (B // Bb,)

    kernel = functools.partial(
        _ts_skew_kernel,
        window=window,
        strides=strides,
        s_reg=s_reg,
        extra_start=extra_start,
        eps=float(eps),
    )

    return pl.pallas_call(
        kernel,
        out_shape=jax.ShapeDtypeStruct((B, F, S), x.dtype),
        grid=grid,
        in_specs=[pl.BlockSpec((Bb, T, F), lambda b: (b, 0, 0))],
        out_specs=pl.BlockSpec((Bb, F, S), lambda b: (b, 0, 0)),
        compiler_params=pltpu.CompilerParams(
            dimension_semantics=("parallel",)
        ),
    )(x)


def _reference(x, window=5, strides=1, eps=1e-6):
    """Pure-JAX reference mirroring the PyTorch module."""
    B, T, F = x.shape
    iter_list = list(range(0, T - window + 1, strides))
    if (T - window) not in iter_list:
        iter_list.append(T - window)
    cols = []
    for i in iter_list:
        w = x[:, i:i + window, :].astype(jnp.float32)        # (B, window, F)
        mu = jnp.mean(w, axis=1, keepdims=True)
        d = w - mu
        m2 = jnp.mean(d * d, axis=1) + eps
        m3 = jnp.mean(d * d * d, axis=1)
        sk = m3 / jnp.power(m2, 1.5)
        sk = jnp.where(jnp.isnan(sk), 0.0, sk)
        cols.append(sk)                                      # (B, F)
    out = jnp.stack(cols, axis=1)                            # (B, S, F)
    return jnp.transpose(out, (0, 2, 1)).astype(x.dtype)     # (B, F, S)


if __name__ == "__main__":
    key = jax.random.PRNGKey(0)
    B, T, F = 2, 16, 8          # batch, time steps, features
    window, strides = 5, 1

    x = jax.random.normal(key, (B, T, F), dtype=jnp.float32)

    out = ts_skew(x, window=window, strides=strides)
    out = jax.block_until_ready(out)

    ref = _reference(x, window=window, strides=strides)
    assert out.shape == ref.shape == (B, F, T - window + 1), out.shape
    assert jnp.allclose(out, ref, atol=1e-5, rtol=1e-5), "mismatch vs reference"

    print("KERNEL_OK")
</pallas_src>

<mosaic_0001>
module attributes {stable_mosaic.version = 11 : i64} {
  func.func @_ts_skew_kernel(%arg0: i32, %arg1: memref<1x16x8xf32, #tpu.memory_space<vmem>>, %arg2: memref<1x8x12xf32, #tpu.memory_space<vmem>>) attributes {dimension_semantics = [#tpu.dimension_semantics<parallel>], iteration_bounds = array<i64: 2>, scalar_prefetch = 0 : i64, scratch_operands = 0 : i64, tpu.core_type = #tpu.core_type<tc>, window_params = [{transform_indices = @transform_0, window_bounds = array<i64: 1, 16, 8>}, {transform_indices = @transform_1, window_bounds = array<i64: 1, 8, 12>}]} {
    %c0 = arith.constant 0 : index
    %c0_0 = arith.constant 0 : index
    %c0_1 = arith.constant 0 : index
    %0 = vector.load %arg1[%c0, %c0_0, %c0_1] : memref<1x16x8xf32, #tpu.memory_space<vmem>>, vector<1x12x8xf32>
    %c0_2 = arith.constant 0 : index
    %c1 = arith.constant 1 : index
    %c0_3 = arith.constant 0 : index
    %1 = vector.load %arg1[%c0_2, %c1, %c0_3] : memref<1x16x8xf32, #tpu.memory_space<vmem>>, vector<1x12x8xf32>
    %c0_4 = arith.constant 0 : index
    %c2 = arith.constant 2 : index
    %c0_5 = arith.constant 0 : index
    %2 = vector.load %arg1[%c0_4, %c2, %c0_5] : memref<1x16x8xf32, #tpu.memory_space<vmem>>, vector<1x12x8xf32>
    %c0_6 = arith.constant 0 : index
    %c3 = arith.constant 3 : index
    %c0_7 = arith.constant 0 : index
    %3 = vector.load %arg1[%c0_6, %c3, %c0_7] : memref<1x16x8xf32, #tpu.memory_space<vmem>>, vector<1x12x8xf32>
    %c0_8 = arith.constant 0 : index
    %c4 = arith.constant 4 : index
    %c0_9 = arith.constant 0 : index
    %4 = vector.load %arg1[%c0_8, %c4, %c0_9] : memref<1x16x8xf32, #tpu.memory_space<vmem>>, vector<1x12x8xf32>
    %5 = arith.addf %0, %1 : vector<1x12x8xf32>
    %6 = arith.addf %5, %2 : vector<1x12x8xf32>
    %7 = arith.addf %6, %3 : vector<1x12x8xf32>
    %8 = arith.addf %7, %4 : vector<1x12x8xf32>
    %cst = arith.constant 2.000000e-01 : f32
    %9 = vector.broadcast %cst : f32 to vector<1x12x8xf32>
    %10 = arith.mulf %8, %9 : vector<1x12x8xf32>
    %cst_10 = arith.constant 0.000000e+00 : f32
    %11 = vector.broadcast %cst_10 : f32 to vector<1x12x8xf32>
    %cst_11 = arith.constant 0.000000e+00 : f32
    %12 = vector.broadcast %cst_11 : f32 to vector<1x12x8xf32>
    %13 = arith.subf %0, %10 : vector<1x12x8xf32>
    %14 = arith.mulf %13, %13 : vector<1x12x8xf32>
    %15 = arith.addf %11, %14 : vector<1x12x8xf32>
    %16 = arith.mulf %14, %13 : vector<1x12x8xf32>
    %17 = arith.addf %12, %16 : vector<1x12x8xf32>
    %18 = arith.subf %1, %10 : vector<1x12x8xf32>
    %19 = arith.mulf %18, %18 : vector<1x12x8xf32>
    %20 = arith.addf %15, %19 : vector<1x12x8xf32>
    %21 = arith.mulf %19, %18 : vector<1x12x8xf32>
    %22 = arith.addf %17, %21 : vector<1x12x8xf32>
    %23 = arith.subf %2, %10 : vector<1x12x8xf32>
    %24 = arith.mulf %23, %23 : vector<1x12x8xf32>
    %25 = arith.addf %20, %24 : vector<1x12x8xf32>
    %26 = arith.mulf %24, %23 : vector<1x12x8xf32>
    %27 = arith.addf %22, %26 : vector<1x12x8xf32>
    %28 = arith.subf %3, %10 : vector<1x12x8xf32>
    %29 = arith.mulf %28, %28 : vector<1x12x8xf32>
    %30 = arith.addf %25, %29 : vector<1x12x8xf32>
    %31 = arith.mulf %29, %28 : vector<1x12x8xf32>
    %32 = arith.addf %27, %31 : vector<1x12x8xf32>
    %33 = arith.subf %4, %10 : vector<1x12x8xf32>
    %34 = arith.mulf %33, %33 : vector<1x12x8xf32>
    %35 = arith.addf %30, %34 : vector<1x12x8xf32>
    %36 = arith.mulf %34, %33 : vector<1x12x8xf32>
    %37 = arith.addf %32, %36 : vector<1x12x8xf32>
    %cst_12 = arith.constant 2.000000e-01 : f32
    %38 = vector.broadcast %cst_12 : f32 to vector<1x12x8xf32>
    %39 = arith.mulf %35, %38 : vector<1x12x8xf32>
    %cst_13 = arith.constant 9.99999997E-7 : f32
    %40 = vector.broadcast %cst_13 : f32 to vector<1x12x8xf32>
    %41 = arith.addf %39, %40 : vector<1x12x8xf32>
    %cst_14 = arith.constant 2.000000e-01 : f32
    %42 = vector.broadcast %cst_14 : f32 to vector<1x12x8xf32>
    %43 = arith.mulf %37, %42 : vector<1x12x8xf32>
    %44 = math.sqrt %41 : vector<1x12x8xf32>
    %45 = arith.mulf %41, %44 : vector<1x12x8xf32>
    %46 = arith.divf %43, %45 : vector<1x12x8xf32>
    %47 = arith.cmpf one, %46, %46 : vector<1x12x8xf32>
    %cst_15 = arith.constant 0.000000e+00 : f32
    %48 = vector.broadcast %cst_15 : f32 to vector<1x12x8xf32>
    %49 = arith.select %47, %48, %46 : vector<1x12x8xi1>, vector<1x12x8xf32>
    %50 = tpu.transpose %49, [0, 2, 1] : vector<1x12x8xf32> -> vector<1x8x12xf32>
    %c0_16 = arith.constant 0 : index
    %c0_17 = arith.constant 0 : index
    %c0_18 = arith.constant 0 : index
    %51 = vector.load %arg2[%c0_16, %c0_17, %c0_18] : memref<1x8x12xf32, #tpu.memory_space<vmem>>, vector<1x8x12xf32>
    tpu.vector_store %arg2[%c0_16, %c0_17, %c0_18], %50 {strides = array<i32>} : memref<1x8x12xf32, #tpu.memory_space<vmem>>, vector<1x8x12xf32>,
    return
  }
  func.func @transform_0(%arg0: i32) -> (i32, i32, i32) {
    %c0_i32 = arith.constant 0 : i32
    %c0_i32_0 = arith.constant 0 : i32
    %c0_i32_1 = arith.constant 0 : i32
    return %arg0, %c0_i32, %c0_i32_0 : i32, i32, i32
  }
  func.func @transform_1(%arg0: i32) -> (i32, i32, i32) {
    %c0_i32 = arith.constant 0 : i32
    %c0_i32_0 = arith.constant 0 : i32
    %c0_i32_1 = arith.constant 0 : i32
    return %arg0, %c0_i32, %c0_i32_0 : i32, i32, i32
  }
}

</mosaic_0001>

<llo_original>
// kernel: tpu_custom_call.1
$region0: #{tpu_custom_call.1}
  #allocation0 [shape = 'u32[]', space=smem, size = 0x4, offset = 0x4, fixed_abs, tag = 'smem constant byte address 0x4 - core index']
  #allocation1 [shape = 'u32[72,128]{1,0:T(1,128)}', space=vmem, size = 0x9000, scoped, tag = 'internal scratch']
  %s0 = inlined_call_operand.vmem [shape: f32[2,16,8], index: 0, kind: input, shape index: {}]
  %s1 = inlined_call_operand.hbm [shape: f32[2,8,12], index: 1, kind: output, shape index: {}]
  %s2 = sld [smem:[#allocation0]]
  $region37: #{tpu_custom_call.1} parent=0
    _
  %s4 = ssub.s32 1, %s2
  %s5 = scalar_select 0, %s4, %s2
  $region1: #{tpu_custom_call.1} parent=0
    #allocation2 [shape = 'u8[8192]{0}', space=vmem, size = 0x2000, scoped, tag = 'output window, operand 0']
    #allocation3 [shape = 's32[2]{0}', space=sflag, size = 0x8, scoped, tag = 'scoped memory for tpu_custom_call.1']
    %6 = vsyncpa [#allocation3], 0
    %s7 = scalar_lea.sflag [#allocation3], 1
    %8 = vsyncpa %s7, 0
    loop: start=0, step=1, limit=4
    $region2: #{tpu_custom_call.1} parent=1 // loop_pre_header
      _
    $region3: #{tpu_custom_call.1} parent=1 // loop_header
      %s10 = sphi 0, %s14
      %p11 = scmp.ge.s32.totalorder %s10, 4
      %s20 = sphi 0, %s22
      %s23 = sphi 0, %s20
      %s24 = sphi 0, %s23
      %s40 = sphi 0, %s24
      %s46 = sphi 0, %s48
      %s49 = sphi 0, %s46
      %s50 = sphi 0, %s49
      %s66 = sphi 0, %s50
    $region4: #{tpu_custom_call.1} parent=1 // loop_header_branch
      %13 = sbr.rel (%p11) target = $region8
    $region5: #{tpu_custom_call.1} parent=1 // loop_body
      %s15 = ssub.s32 %s10, 1
      %s16 = ssub.s32 %s10, 2
      %s17 = sadd.s32 %s10, 1
      %s18 = ssub.s32 %s10, %s17
      %p19 = scmp.eq.s32.totalorder %s18, 0
      %s21 = sadd.s32 %s20, 1
      %s22 = scalar_select %p19, %s20, %s21
      %p25 = pneg %p19
      %p26 = scmp.eq.s32.totalorder %s10, 1
      %p27 = por %p25, %p26
      %p28 = scmp.ne.s32.totalorder %s20, %s23
      %p29 = scmp.eq.s32.totalorder %s10, 0
      %p30 = por %p28, %p29
      %p31 = scmp.ne.s32.totalorder %s20, %s23
      %p32 = scmp.eq.s32.totalorder %s15, 1
      %p33 = por %p31, %p32
      %p34 = scmp.ne.s32.totalorder %s23, %s24
      %p35 = scmp.eq.s32.totalorder %s15, 0
      %p36 = por %p34, %p35
      %p37 = scmp.ne.s32.totalorder %s23, %s24
      %p38 = scmp.eq.s32.totalorder %s16, 1
      %p39 = por %p37, %p38
      %p41 = scmp.ne.s32.totalorder %s24, %s40
      %p42 = scmp.eq.s32.totalorder %s16, 0
      %p43 = por %p41, %p42
      %s44 = ssub.s32 %s10, %s17
      %p45 = scmp.eq.s32.totalorder %s44, 0
      %s47 = sadd.s32 %s46, 1
      %s48 = scalar_select %p45, %s46, %s47
      %p51 = pneg %p45
      %p52 = scmp.eq.s32.totalorder %s10, 1
      %p53 = por %p51, %p52
      %p54 = scmp.ne.s32.totalorder %s46, %s49
      %p55 = scmp.eq.s32.totalorder %s10, 0
      %p56 = por %p54, %p55
      %p57 = scmp.ne.s32.totalorder %s46, %s49
      %p58 = scmp.eq.s32.totalorder %s15, 1
      %p59 = por %p57, %p58
      %p60 = scmp.ne.s32.totalorder %s49, %s50
      %p61 = scmp.eq.s32.totalorder %s15, 0
      %p62 = por %p60, %p61
      %p63 = scmp.ne.s32.totalorder %s49, %s50
      %p64 = scmp.eq.s32.totalorder %s16, 1
      %p65 = por %p63, %p64
      %p67 = scmp.ne.s32.totalorder %s50, %s66
      %p68 = scmp.eq.s32.totalorder %s16, 0
      %p69 = por %p67, %p68
      %p70 = scmp.le.s32.totalorder 1, %s10
      %p71 = scmp.lt.s32.totalorder %s10, 3
      %p72 = pnand %p70, %p71
      %p73 = pneg %p72
      // Predicated region
      $region9: #{tpu_custom_call.1} parent=5 // pred_check
        _
      $region10: #{tpu_custom_call.1} parent=5 // pred_check_branch
        %75 = sbr.rel (%p72) target = $region12
      $region11: #{tpu_custom_call.1} parent=5 // pred_region
        %s76 = ssub.s32 %s10, 1
      $region12: #{tpu_custom_call.1} parent=5 // pred_fallthru
        _
      %p77 = scmp.lt.s32.totalorder %s10, 2
      // Predicated region
      $region13: #{tpu_custom_call.1} parent=5 // pred_check
        %p78 = pneg %p77
      $region14: #{tpu_custom_call.1} parent=5 // pred_check_branch
        %80 = sbr.rel (%p78) target = $region16
      $region15: #{tpu_custom_call.1} parent=5 // pred_region
        // Predicated region
        $region17: #{tpu_custom_call.1} parent=15 // pred_check
          %p81 = pneg %p30
        $region18: #{tpu_custom_call.1} parent=15 // pred_check_branch
          %83 = sbr.rel (%p81) target = $region20
        $region19: #{tpu_custom_call.1} parent=15 // pred_region
          %p84 = scmp.lt.s32.totalorder %s10, 1
          %s85 = scalar_select %p84, %s10, 1
          %s86 = smul.addr %s85, 2
          %s87 = smul.addr %s86, 8
          %s88 = scalar_lea.vmem %s0, %s87
        $region20: #{tpu_custom_call.1} parent=15 // pred_fallthru
          _
      $region16: #{tpu_custom_call.1} parent=5 // pred_fallthru
        _
      %p89 = scmp.le.s32.totalorder 1, %s10
      %p90 = scmp.lt.s32.totalorder %s10, 3
      %p91 = pnand %p89, %p90
      %p92 = pneg %p91
      // Predicated region
      $region21: #{tpu_custom_call.1} parent=5 // pred_check
        _
      $region22: #{tpu_custom_call.1} parent=5 // pred_check_branch
        %94 = sbr.rel (%p91) target = $region24
      $region23: #{tpu_custom_call.1} parent=5 // pred_region
        %s95 = ssub.s32 %s10, 1
        %p96 = scmp.lt.s32.totalorder %s15, 1
        %s97 = scalar_select %p96, %s15, 1
        %s98 = smul.addr %s97, 2
        %s99 = smul.addr %s98, 8
        %s100 = scalar_lea.vmem %s0, %s99
        %p101 = pneg %p36
        %p102 = pneg %p33
        %p103 = pneg %p62
        %p104 = pneg %p59
        %s105 = sand.u32 %s49, 1
        %s106 = scalar_lea.sflag [#allocation3], %s105
        %s107 = sand.u32 %s49, 1
        %s108 = smul.addr %s107, 8
        %s109 = scalar_lea.vmem [#allocation2], %s108
        %p110 = scmp.lt.s32.totalorder %s15, 1
        %s111 = scalar_select %p110, %s15, 1
        %s112 = smul.addr %s111, 2
        %s113 = smul.addr %s112, 8
        %s114 = scalar_lea.vmem %s0, %s113
        %v115 = vld [vmem:[%s114] sm:$0xff]
        %v116 = vld [vmem:[%s114 + $0x8] sm:$0xf]
        %v117 = vld [vmem:[%s114 + $0x1] sm:$0xff]
        %v118 = vld [vmem:[%s114 + $0x9] sm:$0xf]
        %v119 = vld [vmem:[%s114 + $0x2] sm:$0xff]
        %v120 = vld [vmem:[%s114 + $0xa] sm:$0xf]
        %v121 = vld [vmem:[%s114 + $0x3] sm:$0xff]
        %v122 = vld [vmem:[%s114 + $0xb] sm:$0xf]
        %v123 = vld [vmem:[%s114 + $0x4] sm:$0xff]
        %v124 = vld [vmem:[%s114 + $0xc] sm:$0xf]
        %v125 = vadd.f32 %v115, %v117
        %v126 = vadd.f32 %v116, %v118
        %v127 = vadd.f32 %v125, %v119
        %v128 = vadd.f32 %v126, %v120
        %v129 = vadd.f32 %v127, %v121
        %v130 = vadd.f32 %v128, %v122
        %v131 = vadd.f32 %v129, %v123
        %v132 = vadd.f32 %v130, %v124
        %v133 = vmul.f32 %v131, 0.2
        %v134 = vmul.f32 %v132, 0.2
        %v135 = vsub.f32 %v115, %v133
        %v136 = vsub.f32 %v116, %v134
        %v137 = vmul.f32 %v135, %v135
        %v138 = vmul.f32 %v136, %v136
        %v139 = vadd.f32 %v137, 0.0
        %v140 = vadd.f32 %v138, 0.0
        %v141 = vmul.f32 %v137, %v135
        %v142 = vmul.f32 %v138, %v136
        %v143 = vadd.f32 %v141, 0.0
        %v144 = vadd.f32 %v142, 0.0
        %v145 = vsub.f32 %v117, %v133
        %v146 = vsub.f32 %v118, %v134
        %v147 = vmul.f32 %v145, %v145
        %v148 = vmul.f32 %v146, %v146
        %v149 = vadd.f32 %v139, %v147
        %v150 = vadd.f32 %v140, %v148
        %v151 = vmul.f32 %v147, %v145
        %v152 = vmul.f32 %v148, %v146
        %v153 = vadd.f32 %v143, %v151
        %v154 = vadd.f32 %v144, %v152
        %v155 = vsub.f32 %v119, %v133
        %v156 = vsub.f32 %v120, %v134
        %v157 = vmul.f32 %v155, %v155
        %v158 = vmul.f32 %v156, %v156
        %v159 = vadd.f32 %v149, %v157
        %v160 = vadd.f32 %v150, %v158
        %v161 = vmul.f32 %v157, %v155
        %v162 = vmul.f32 %v158, %v156
        %v163 = vadd.f32 %v153, %v161
        %v164 = vadd.f32 %v154, %v162
        %v165 = vsub.f32 %v121, %v133
        %v166 = vsub.f32 %v122, %v134
        %v167 = vmul.f32 %v165, %v165
        %v168 = vmul.f32 %v166, %v166
        %v169 = vadd.f32 %v159, %v167
        %v170 = vadd.f32 %v160, %v168
        %v171 = vmul.f32 %v167, %v165
        %v172 = vmul.f32 %v168, %v166
        %v173 = vadd.f32 %v163, %v171
        %v174 = vadd.f32 %v164, %v172
        %v175 = vsub.f32 %v123, %v133
        %v176 = vsub.f32 %v124, %v134
        %v177 = vmul.f32 %v175, %v175
        %v178 = vmul.f32 %v176, %v176
        %v179 = vadd.f32 %v169, %v177
        %v180 = vadd.f32 %v170, %v178
        %v181 = vmul.f32 %v177, %v175
        %v182 = vmul.f32 %v178, %v176
        %v183 = vadd.f32 %v173, %v181
        %v184 = vadd.f32 %v174, %v182
        %v185 = vmul.f32 %v179, 0.2
        %v186 = vmul.f32 %v180, 0.2
        %v187 = vadd.f32 %v185, 1e-06
        %v188 = vadd.f32 %v186, 1e-06
        %v189 = vmul.f32 %v183, 0.2
        %v190 = vmul.f32 %v184, 0.2
        %v191 = vrsqrt.pop %v187
        %v192 = vmul.f32 %v191, %v187
        %v193 = vmul.f32 %v192, %v191
        %v194 = vmul.f32 0.5, %v193
        %v195 = vsub.f32 1.5, %v194
        %v196 = vmul.f32 %v191, %v195
        %v197 = vmul.f32 %v187, %v196
        %vm198 = vcmp.eq.f32.partialorder %v187, inf
        %v199 = vsel %vm198, %v187, %v197
        %vm200 = vcmp.eq.f32.partialorder %v187, 0.0
        %v201 = vand.u32 %v187, 2147483648
        %v202 = vsel %vm200, %v201, %v199
        %v203 = vrsqrt.pop %v188
        %v204 = vmul.f32 %v203, %v188
        %v205 = vmul.f32 %v204, %v203
        %v206 = vmul.f32 0.5, %v205
        %v207 = vsub.f32 1.5, %v206
        %v208 = vmul.f32 %v203, %v207
        %v209 = vmul.f32 %v188, %v208
        %vm210 = vcmp.eq.f32.partialorder %v188, inf
        %v211 = vsel %vm210, %v188, %v209
        %vm212 = vcmp.eq.f32.partialorder %v188, 0.0
        %v213 = vand.u32 %v188, 2147483648
        %v214 = vsel %vm212, %v213, %v211
        %v215 = vmul.f32 %v187, %v202
        %v216 = vmul.f32 %v188, %v214
        %v217 = vrcp.pop %v215
        %v218 = vmul.f32 %v215, %v217
        %v219 = vsub.f32 1.0, %v218
        %v220 = vmul.f32 %v217, %v219
        %v221 = vadd.f32 %v217, %v220
        %vm222 = vweird.f32 %v215
        %vm223 = vweird.f32 %v217
        %vm224 = vmor %vm222, %vm223
        %v225 = vsel %vm224, %v217, %v221
        %v226 = vand.u32 2147483647, %v215
        %vm227 = vcmp.eq.f32.partialorder %v226, 8.507059e+37
        %v228 = vand.u32 %v215, 2147483648
        %v229 = vor.u32 1.1754944e-38, %v228
        %v230 = vsel %vm227, %v229, %v225
        %v231 = vmul.f32 %v189, %v230
        %v232 = vrcp.pop %v216
        %v233 = vmul.f32 %v216, %v232
        %v234 = vsub.f32 1.0, %v233
        %v235 = vmul.f32 %v232, %v234
        %v236 = vadd.f32 %v232, %v235
        %vm237 = vweird.f32 %v216
        %vm238 = vweird.f32 %v232
        %vm239 = vmor %vm237, %vm238
        %v240 = vsel %vm239, %v232, %v236
        %v241 = vand.u32 2147483647, %v216
        %vm242 = vcmp.eq.f32.partialorder %v241, 8.507059e+37
        %v243 = vand.u32 %v216, 2147483648
        %v244 = vor.u32 1.1754944e-38, %v243
        %v245 = vsel %vm242, %v244, %v240
        %v246 = vmul.f32 %v190, %v245
        %vm247 = vcmp.ne.f32.partialorder %v231, %v231
        %vm248 = vcmp.ne.f32.partialorder %v246, %v246
        %v249 = vsel %vm247, 0.0, %v231
        %v250 = vsel %vm248, 0.0, %v246
        %251 = vxpose.xlu0.b32.start [1/16] %v249, 128
        %252 = vxpose.xlu0.b32.cont [2/16] %v250, 128
        %253 = vxpose.xlu0.b32.cont [3/16] 0.0, 128
        %254 = vxpose.xlu0.b32.cont [4/16] 0.0, 128
        %255 = vxpose.xlu0.b32.cont [5/16] 0.0, 128
        %256 = vxpose.xlu0.b32.cont [6/16] 0.0, 128
        %257 = vxpose.xlu0.b32.cont [7/16] 0.0, 128
        %258 = vxpose.xlu0.b32.cont [8/16] 0.0, 128
        %259 = vxpose.xlu0.b32.cont [9/16] 0.0, 128
        %260 = vxpose.xlu0.b32.cont [10/16] 0.0, 128
        %261 = vxpose.xlu0.b32.cont [11/16] 0.0, 128
        %262 = vxpose.xlu0.b32.cont [12/16] 0.0, 128
        %263 = vxpose.xlu0.b32.cont [13/16] 0.0, 128
        %264 = vxpose.xlu0.b32.cont [14/16] 0.0, 128
        %265 = vxpose.xlu0.b32.cont [15/16] 0.0, 128
        %266 = vxpose.xlu0.b32.end [16/16] 0.0, 128
        %v267 = vpop.trf.xlu0
        %v268 = vpop.trf.xlu0
        %v269 = vpop.trf.xlu0
        %v270 = vpop.trf.xlu0
        %v271 = vpop.trf.xlu0
        %v272 = vpop.trf.xlu0
        %v273 = vpop.trf.xlu0
        %v274 = vpop.trf.xlu0
        %v275 = vpop.trf.xlu0
        %v276 = vpop.trf.xlu0
        %v277 = vpop.trf.xlu0
        %v278 = vpop.trf.xlu0
        %v279 = vpop.trf.xlu0
        %v280 = vpop.trf.xlu0
        %v281 = vpop.trf.xlu0
        %v282 = vpop.trf.xlu0
        %vm283 = vcmask 97280
        %284 = vst.msk [vmem:[%s109] sm:$0xff] %vm283, %v267
        %s285 = sand.u32 %s49, 1
        %s286 = scalar_lea.sflag [#allocation3], %s285
        %s287 = sand.u32 %s49, 1
        %s288 = smul.addr %s287, 8
        %s289 = scalar_lea.vmem [#allocation2], %s288
        // Predicated region
        $region25: #{tpu_custom_call.1} parent=23 // pred_check
          %p290 = pneg %p59
        $region26: #{tpu_custom_call.1} parent=23 // pred_check_branch
          %292 = sbr.rel (%p290) target = $region28
        $region27: #{tpu_custom_call.1} parent=23 // pred_region
          %294 = vsyncadd %s286, 0
          %s295 = smul.addr %s15, 8
          %s296 = scalar_lea.hbm %s1, %s295
          %s298 = sshll.u32 %s289, 4
          %s299 = int_to_ptr.vmem [resolvable:$true] %s298
          %s300 = sshll.u32 %s296, 4
          %s301 = int_to_ptr.hbm [resolvable:$true] %s300
          %303 = dma.vmem_to_hbm [thread:$0]  %s299, 128, %s301, %s286
        $region28: #{tpu_custom_call.1} parent=23 // pred_fallthru
          _
      $region24: #{tpu_custom_call.1} parent=5 // pred_fallthru
        _
      %p304 = scmp.le.s32.totalorder 2, %s10
      // Predicated region
      $region29: #{tpu_custom_call.1} parent=5 // pred_check
        %p305 = pneg %p304
      $region30: #{tpu_custom_call.1} parent=5 // pred_check_branch
        %307 = sbr.rel (%p305) target = $region32
      $region31: #{tpu_custom_call.1} parent=5 // pred_region
        %s308 = ssub.s32 %s10, 2
        // Predicated region
        $region33: #{tpu_custom_call.1} parent=31 // pred_check
          %p309 = pneg %p65
        $region34: #{tpu_custom_call.1} parent=31 // pred_check_branch
          %311 = sbr.rel (%p309) target = $region36
        $region35: #{tpu_custom_call.1} parent=31 // pred_region
          %s312 = sand.u32 %s50, 1
          %s313 = scalar_lea.sflag [#allocation3], %s312
          %s314 = sand.u32 %s50, 1
          %s315 = smul.addr %s314, 8
          %s316 = scalar_lea.vmem [#allocation2], %s315
          %318 = dma.done %s313, 128
        $region36: #{tpu_custom_call.1} parent=31 // pred_fallthru
          _
      $region32: #{tpu_custom_call.1} parent=5 // pred_fallthru
        _
    $region6: #{tpu_custom_call.1} parent=1 // loop_footer
      %s14 = sadd.s32 1, %s10
    $region7: #{tpu_custom_call.1} parent=1 // loop_footer_branch
      %9 = sbr.rel target = $region3
    $region8: #{tpu_custom_call.1} parent=1 // loop_exit
      _
    %319 = vsyncpa [#allocation3], 1
    %s320 = scalar_lea.sflag [#allocation3], 1
    %321 = vsyncpa %s320, 1

</llo_original>
